<compile_context>
chip_gen: v7x
topology: tpu7x:2x2x1
jax: 0.10.0
libtpu: 0.0.40
codegen_flags: <defaults>
</compile_context>

<pallas_src>
import functools

import jax
import jax.numpy as jnp
from jax.experimental import pallas as pl
from jax.experimental.pallas import tpu as pltpu


def _round_up(x, m):
    return ((x + m - 1) // m) * m


def _action_kernel(h_ref, w_ref, b_ref, out_ref):
    # h_ref: (TB, 256)  w_ref: (1, 256)  b_ref: (1, 1)  out_ref: (TB, 1)
    h = h_ref[...].astype(jnp.float32)
    w = w_ref[...].astype(jnp.float32)              # broadcast row over sublanes
    acc = jnp.sum(h * w, axis=-1, keepdims=True)    # VPU mul + XLU lane reduce
    out_ref[...] = (acc + b_ref[...]).astype(out_ref.dtype)


@functools.partial(jax.jit, static_argnames=("block_b",))
def action_forward(h, w1, b1, w2, b2, *, block_b=512):
    """ACTION forward.  h: (B, 256); w1: (32, 256); b1: (32,); w2: (1, 32); b2: (1,)."""
    B = h.shape[0]

    # --- fuse the two linear layers (no activation between them) ------------
    w_eff = jnp.dot(w2.astype(jnp.float32), w1.astype(jnp.float32))      # (1, 256)
    b_eff = (jnp.dot(w2.astype(jnp.float32), b1.astype(jnp.float32))
             + b2.astype(jnp.float32)).reshape(1, 1)                     # (1, 1)

    # --- batch tiling --------------------------------------------------------
    TB = min(block_b, _round_up(B, 8))          # TB is a multiple of 8
    B_pad = _round_up(B, TB)
    if B_pad != B:
        h = jnp.pad(h, ((0, B_pad - B), (0, 0)))
    grid = (pl.cdiv(B_pad, TB),)

    out = pl.pallas_call(
        _action_kernel,
        out_shape=jax.ShapeDtypeStruct((B_pad, 1), jnp.float32),
        grid=grid,
        in_specs=[
            pl.BlockSpec((TB, 256), lambda i: (i, 0)),   # h tile (pipelined)
            pl.BlockSpec((1, 256), lambda i: (0, 0)),    # fused weight row
            pl.BlockSpec((1, 1), lambda i: (0, 0)),      # fused bias
        ],
        out_specs=pl.BlockSpec((TB, 1), lambda i: (i, 0)),
        compiler_params=pltpu.CompilerParams(
            dimension_semantics=("parallel",),
        ),
    )(h, w_eff, b_eff)

    return out[:B]


def reference_forward(h, w1, b1, w2, b2):
    hid = h @ w1.T + b1
    return hid @ w2.T + b2


if __name__ == "__main__":
    key = jax.random.PRNGKey(0)
    k_h, k_w1, k_b1, k_w2, k_b2 = jax.random.split(key, 5)

    B = 8  # small batch
    h = jax.random.normal(k_h, (B, 256), dtype=jnp.float32)

    # Deterministic parameter init (PyTorch-Linear-style uniform bounds).
    bound1 = 1.0 / jnp.sqrt(256.0)
    w1 = jax.random.uniform(k_w1, (32, 256), jnp.float32, -bound1, bound1)
    b1 = jax.random.uniform(k_b1, (32,), jnp.float32, -bound1, bound1)
    bound2 = 1.0 / jnp.sqrt(32.0)
    w2 = jax.random.uniform(k_w2, (1, 32), jnp.float32, -bound2, bound2)
    b2 = jax.random.uniform(k_b2, (1,), jnp.float32, -bound2, bound2)

    out = action_forward(h, w1, b1, w2, b2)
    out = jax.block_until_ready(out)

    ref = reference_forward(h, w1, b1, w2, b2)
    assert out.shape == (B, 1)
    # Fused-weight sum order differs slightly from the two-matmul reference;
    # 1e-5 tolerance is ample for f32.
    assert jnp.allclose(out, ref, atol=1e-5, rtol=1e-5), "mismatch vs reference"

    print("KERNEL_OK")
</pallas_src>

<mosaic_0001>
module attributes {stable_mosaic.version = 11 : i64} {
  func.func @_action_kernel(%arg0: i32, %arg1: memref<8x256xf32, #tpu.memory_space<vmem>>, %arg2: memref<1x256xf32, #tpu.memory_space<vmem>>, %arg3: memref<1x1xf32, #tpu.memory_space<vmem>>, %arg4: memref<8x1xf32, #tpu.memory_space<vmem>>) attributes {dimension_semantics = [#tpu.dimension_semantics<parallel>], iteration_bounds = array<i64: 1>, scalar_prefetch = 0 : i64, scratch_operands = 0 : i64, tpu.core_type = #tpu.core_type<tc>, window_params = [{transform_indices = @transform_0, window_bounds = array<i64: 8, 256>}, {pipeline_mode = #tpu.pipeline_mode<synchronous>, transform_indices = @transform_1, window_bounds = array<i64: 1, 256>}, {pipeline_mode = #tpu.pipeline_mode<synchronous>, transform_indices = @transform_2, window_bounds = array<i64: 1, 1>}, {transform_indices = @transform_3, window_bounds = array<i64: 8, 1>}]} {
    %c0 = arith.constant 0 : index
    %c0_0 = arith.constant 0 : index
    %0 = vector.load %arg1[%c0, %c0_0] : memref<8x256xf32, #tpu.memory_space<vmem>>, vector<8x256xf32>
    %c0_1 = arith.constant 0 : index
    %c0_2 = arith.constant 0 : index
    %1 = vector.load %arg2[%c0_1, %c0_2] : memref<1x256xf32, #tpu.memory_space<vmem>>, vector<1x256xf32>
    %2 = vector.broadcast %1 : vector<1x256xf32> to vector<8x256xf32>
    %3 = arith.mulf %0, %2 : vector<8x256xf32>
    %cst = arith.constant dense<0.000000e+00> : vector<8xf32>
    %4 = vector.multi_reduction <add>, %3, %cst [1] : vector<8x256xf32> to vector<8xf32>
    %5 = vector.shape_cast %4 : vector<8xf32> to vector<8x1xf32>
    %c0_3 = arith.constant 0 : index
    %c0_4 = arith.constant 0 : index
    %6 = vector.load %arg3[%c0_3, %c0_4] : memref<1x1xf32, #tpu.memory_space<vmem>>, vector<1x1xf32>
    %7 = vector.broadcast %6 : vector<1x1xf32> to vector<8x1xf32>
    %8 = arith.addf %5, %7 : vector<8x1xf32>
    %c0_5 = arith.constant 0 : index
    %c0_6 = arith.constant 0 : index
    %9 = vector.load %arg4[%c0_5, %c0_6] : memref<8x1xf32, #tpu.memory_space<vmem>>, vector<8x1xf32>
    tpu.vector_store %arg4[%c0_5, %c0_6], %8 {strides = array<i32>} : memref<8x1xf32, #tpu.memory_space<vmem>>, vector<8x1xf32>,
    return
  }
  func.func @transform_0(%arg0: i32) -> (i32, i32) {
    %c0_i32 = arith.constant 0 : i32
    %c0_i32_0 = arith.constant 0 : i32
    return %arg0, %c0_i32 : i32, i32
  }
  func.func @transform_1(%arg0: i32) -> (i32, i32) {
    %c0_i32 = arith.constant 0 : i32
    %c0_i32_0 = arith.constant 0 : i32
    %c0_i32_1 = arith.constant 0 : i32
    return %c0_i32, %c0_i32_0 : i32, i32
  }
  func.func @transform_2(%arg0: i32) -> (i32, i32) {
    %c0_i32 = arith.constant 0 : i32
    %c0_i32_0 = arith.constant 0 : i32
    %c0_i32_1 = arith.constant 0 : i32
    return %c0_i32, %c0_i32_0 : i32, i32
  }
  func.func @transform_3(%arg0: i32) -> (i32, i32) {
    %c0_i32 = arith.constant 0 : i32
    %c0_i32_0 = arith.constant 0 : i32
    return %arg0, %c0_i32 : i32, i32
  }
}

</mosaic_0001>

<llo_original>
// kernel: action_forward.1
$region0: #{action_forward.1}
  #allocation0 [shape = 'u32[]', space=smem, size = 0x4, offset = 0x4, fixed_abs, tag = 'smem constant byte address 0x4 - core index']
  #allocation1 [shape = 'u32[144,128]{1,0:T(1,128)}', space=vmem, size = 0x12000, scoped, tag = 'internal scratch']
  #allocation2 [shape = 'f32[1,1]{1,0:T(1,128)S(1)}', space=vmem, size = 0x200, scoped, tag = 'scoped memory for action_forward.1']
  %s0 = inlined_call_operand.vmem [shape: f32[8,256], index: 0, kind: input, shape index: {}]
  %s1 = inlined_call_operand.vmem [shape: f32[1,256], index: 1, kind: input, shape index: {}]
  %s2 = inlined_call_operand.<no memory space> [shape: f32[1,1], index: 2, kind: input, shape index: {}]
  %s3 = inlined_call_operand.vmem [shape: f32[8,1], index: 3, kind: output, shape index: {}]
  %s4 = sld [smem:[#allocation0]]
  $region22: #{action_forward.1} parent=0
    _
  %s6 = ssub.s32 1, %s4
  %s7 = scalar_select 0, %s6, %s4
  %v8 = vstv %s2
  %9 = vst [vmem:[#allocation2] sm:$0x1] %v8
  // Predicated region
  $region2: #{action_forward.1} parent=0 // pred_check
    _
  $region3: #{action_forward.1} parent=0 // pred_check_branch
    %11 = sbr.rel (0) target = $region5
  $region4: #{action_forward.1} parent=0 // pred_region
    _
  $region5: #{action_forward.1} parent=0 // pred_fallthru
    _
  // Predicated region
  $region6: #{action_forward.1} parent=0 // pred_check
    _
  $region7: #{action_forward.1} parent=0 // pred_check_branch
    %13 = sbr.rel (0) target = $region9
  $region8: #{action_forward.1} parent=0 // pred_region
    _
  $region9: #{action_forward.1} parent=0 // pred_fallthru
    _
  // Predicated region
  $region10: #{action_forward.1} parent=0 // pred_check
    _
  $region11: #{action_forward.1} parent=0 // pred_check_branch
    %15 = sbr.rel (0) target = $region13
  $region12: #{action_forward.1} parent=0 // pred_region
    _
  $region13: #{action_forward.1} parent=0 // pred_fallthru
    _
  %v16 = vld [vmem:[%s0] sm:$0xff]
  %v17 = vld [vmem:[%s0 + $0x8] sm:$0xff]
  %v18 = vld [vmem:[%s1] sm:$0x3]
  %v20 = vlaneseq
  %v21 = vshrl.u32 %v20, 7
  %v22 = vsub.s32 0, %v21
  %v23 = vrot.slane %v18, %v22
  %v24 = vlaneseq
  %v25 = vshrl.u32 %v24, 7
  %v26 = vsub.s32 1, %v25
  %v27 = vrot.slane %v18, %v26
  %v30 = vmul.f32 %v16, %v23
  %v31 = vmul.f32 %v17, %v27
  %v32 = vadd.f32 %v30, %v31
  %33 = vadd.xlane.f32.xlu0 %v32
  %v34 = vpop.xlane.xlu0 %33
  %v35 = vld [vmem:[#allocation2] sm:$0x1]
  %v37 = vlaneseq
  %v38 = vshrl.u32 %v37, 7
  %v39 = vsub.s32 0, %v38
  %v40 = vrot.slane %v35, %v39
  %v42 = vadd.f32 %v34, %v40
  %vm43 = vcmask 7168
  %44 = vst.msk [vmem:[%s3] sm:$0xff] %vm43, %v42
  // Predicated region
  $region14: #{action_forward.1} parent=0 // pred_check
    _
  $region15: #{action_forward.1} parent=0 // pred_check_branch
    %46 = sbr.rel (0) target = $region17
  $region16: #{action_forward.1} parent=0 // pred_region
    _
  $region17: #{action_forward.1} parent=0 // pred_fallthru
    _
  // Predicated region
  $region18: #{action_forward.1} parent=0 // pred_check
    _
  $region19: #{action_forward.1} parent=0 // pred_check_branch
    %48 = sbr.rel (0) target = $region21
  $region20: #{action_forward.1} parent=0 // pred_region
    _
  $region21: #{action_forward.1} parent=0 // pred_fallthru
    _

</llo_original>
